<compile_context>
chip_gen: v7x
topology: tpu7x:2x2x1
jax: 0.10.0
libtpu: 0.0.40
codegen_flags: <defaults>
</compile_context>

<pallas_src>
import math

import jax
import jax.numpy as jnp
from jax import lax
from jax.experimental import pallas as pl
from jax.experimental.pallas import tpu as pltpu


def _erf(x):
    """Abramowitz & Stegun 7.1.26 erf approximation (|err| ~ 1e-7 before the
    approximate reciprocal). exp -> EUP, reciprocal -> EUP, rest -> VPU."""
    p = 0.3275911
    a1, a2, a3, a4, a5 = (0.254829592, -0.284496736, 1.421413741,
                          -1.453152027, 1.061405429)
    ax = jnp.abs(x)
    # EUP reciprocal instead of a VPU divide (frees the VALU slots).
    t = pl.reciprocal(1.0 + p * ax, approx=True)
    poly = ((((a5 * t + a4) * t + a3) * t + a2) * t + a1) * t
    y = 1.0 - poly * jnp.exp(-ax * ax)
    return jnp.where(x < 0.0, -y, y)


def _gelu(x):
    # torch.nn.GELU() default == exact erf-based GELU.
    return 0.5 * x * (1.0 + _erf(x * 0.7071067811865476))


def _dense_conv_kernel(patch_ref, w_ref, b_ref, out_ref):
    # patch_ref: (1, 9*Cin, H*W) bf16   im2col'ed input (rows in kh,kw,cin order)
    # w_ref    : (Cout, 9*Cin)   bf16   conv weights, flattened the same way
    # b_ref    : (Cout, 1)       f32
    # out_ref  : (1, Cout, H*W)  f32    lane-dense (H*W on the lane axis)
    acc = jnp.dot(w_ref[...], patch_ref[0],
                  preferred_element_type=jnp.float32)        # (Cout, H*W) f32
    acc = acc + b_ref[...]                                   # lane broadcast
    out_ref[0] = _gelu(acc).astype(out_ref.dtype)


def dense_layer_forward(x_nchw, params):
    """DenseLayer.forward: cat([x, gelu(conv3x3(x)+b)], dim=1). NCHW in/out."""
    w_hwio = params["w"]                       # (3, 3, Cin, Cout) f32
    b = params["b"]                            # (Cout,) f32
    N, Cin, H, W = x_nchw.shape
    Cout = w_hwio.shape[-1]

    # ---- layout glue in plain JAX (tiny tensors; no transposes needed) ----
    # im2col: (N, 9*Cin, H*W), row index = (kh*3 + kw)*Cin + cin, matching
    # w_hwio.reshape(9*Cin, Cout)'s row-major (kh, kw, cin) order.
    xp = jnp.pad(x_nchw, ((0, 0), (0, 0), (1, 1), (1, 1)))
    taps = [xp[:, :, kh:kh + H, kw:kw + W]
            for kh in range(3) for kw in range(3)]           # 9 x (N,Cin,H,W)
    patch = jnp.stack(taps, axis=1).reshape(N, 9 * Cin, H * W)
    patch = patch.astype(jnp.bfloat16)                       # bf16 input DMA

    w_mat = w_hwio.reshape(9 * Cin, Cout).T.astype(jnp.bfloat16)  # (Cout, 9*Cin)
    b2 = b.reshape(Cout, 1).astype(jnp.float32)

    act_flat = pl.pallas_call(
        _dense_conv_kernel,
        out_shape=jax.ShapeDtypeStruct((N, Cout, H * W), jnp.float32),
        grid_spec=pltpu.PrefetchScalarGridSpec(
            num_scalar_prefetch=0,
            grid=(N,),
            in_specs=[
                pl.BlockSpec((1, 9 * Cin, H * W), lambda n: (n, 0, 0)),
                pl.BlockSpec((Cout, 9 * Cin), lambda n: (0, 0)),
                pl.BlockSpec((Cout, 1), lambda n: (0, 0)),
            ],
            out_specs=pl.BlockSpec((1, Cout, H * W), lambda n: (n, 0, 0)),
        ),
        compiler_params=pltpu.CompilerParams(
            dimension_semantics=("parallel",)),
    )(patch, w_mat, b2)

    # torch.cat((x, act(conv(x))), dim=1) -- NCHW-native channel concat (f32 x).
    act = act_flat.reshape(N, Cout, H, W)
    return jnp.concatenate([x_nchw, act], axis=1)


def init_params(key, in_chs, growth_rate):
    """PyTorch Conv2d default init: kaiming_uniform(a=sqrt(5)) + uniform bias."""
    k_w, k_b = jax.random.split(key)
    fan_in = in_chs * 9
    bound = 1.0 / math.sqrt(fan_in)
    w = jax.random.uniform(k_w, (3, 3, in_chs, growth_rate), jnp.float32,
                           -bound, bound)
    b = jax.random.uniform(k_b, (growth_rate,), jnp.float32, -bound, bound)
    return {"w": w, "b": b}


# ---- pure-JAX reference (correctness check only) ----------------------------
def _reference_forward(x_nchw, params):
    x = jnp.transpose(x_nchw, (0, 2, 3, 1))
    y = lax.conv_general_dilated(
        x, params["w"], (1, 1), "SAME",
        dimension_numbers=("NHWC", "HWIO", "NHWC")) + params["b"]
    y = jax.nn.gelu(y, approximate=False)       # exact GELU == torch.nn.GELU()
    out = jnp.concatenate([x, y], axis=-1)
    return jnp.transpose(out, (0, 3, 1, 2))


if __name__ == "__main__":
    key = jax.random.PRNGKey(0)
    kx, kp = jax.random.split(key)

    N, in_chs, H, W = 2, 4, 16, 16
    growth_rate = 32

    x = jax.random.normal(kx, (N, in_chs, H, W), jnp.float32)
    params = init_params(kp, in_chs, growth_rate)

    out = jax.jit(dense_layer_forward)(x, params)
    out = jax.block_until_ready(out)
    assert out.shape == (N, in_chs + growth_rate, H, W)

    ref = _reference_forward(x, params)
    max_err = float(jnp.max(jnp.abs(out - ref)))
    # bf16 MXU inputs (f32 accumulation) + EUP approx reciprocal inside erf
    # => ~1e-2 level absolute error vs the f32/exact-erf reference.
    assert max_err < 4e-2, f"mismatch vs reference: {max_err}"

    print("KERNEL_OK")
</pallas_src>

<mosaic_0001>
module attributes {stable_mosaic.version = 11 : i64} {
  func.func @_dense_conv_kernel(%arg0: i32, %arg1: memref<1x36x256xbf16, #tpu.memory_space<vmem>>, %arg2: memref<32x36xbf16, #tpu.memory_space<vmem>>, %arg3: memref<32x1xf32, #tpu.memory_space<vmem>>, %arg4: memref<1x32x256xf32, #tpu.memory_space<vmem>>) attributes {dimension_semantics = [#tpu.dimension_semantics<parallel>], iteration_bounds = array<i64: 2>, scalar_prefetch = 0 : i64, scratch_operands = 0 : i64, tpu.core_type = #tpu.core_type<tc>, window_params = [{transform_indices = @transform_0, window_bounds = array<i64: 1, 36, 256>}, {pipeline_mode = #tpu.pipeline_mode<synchronous>, transform_indices = @transform_1, window_bounds = array<i64: 32, 36>}, {pipeline_mode = #tpu.pipeline_mode<synchronous>, transform_indices = @transform_2, window_bounds = array<i64: 32, 1>}, {transform_indices = @transform_3, window_bounds = array<i64: 1, 32, 256>}]} {
    %c0 = arith.constant 0 : index
    %c0_0 = arith.constant 0 : index
    %0 = vector.load %arg2[%c0, %c0_0] : memref<32x36xbf16, #tpu.memory_space<vmem>>, vector<32x36xbf16>
    %c0_1 = arith.constant 0 : index
    %c0_2 = arith.constant 0 : index
    %c0_3 = arith.constant 0 : index
    %1 = vector.load %arg1[%c0_1, %c0_2, %c0_3] : memref<1x36x256xbf16, #tpu.memory_space<vmem>>, vector<1x36x256xbf16>
    %2 = vector.shape_cast %1 : vector<1x36x256xbf16> to vector<36x256xbf16>
    %cst = arith.constant dense<0.000000e+00> : vector<32x256xf32>
    %3 = tpu.matmul %0, %2, %cst {dimension_numbers = #tpu.dot_dimension_numbers<[1], [0], [0], [1], [0, 0, 1, 1], [], []>} : vector<32x36xbf16>, vector<36x256xbf16>, vector<32x256xf32> -> vector<32x256xf32>
    %c0_4 = arith.constant 0 : index
    %c0_5 = arith.constant 0 : index
    %4 = vector.load %arg3[%c0_4, %c0_5] : memref<32x1xf32, #tpu.memory_space<vmem>>, vector<32x1xf32>
    %5 = vector.broadcast %4 : vector<32x1xf32> to vector<32x256xf32>
    %6 = arith.addf %3, %5 : vector<32x256xf32>
    %cst_6 = arith.constant 5.000000e-01 : f32
    %7 = vector.broadcast %cst_6 : f32 to vector<32x256xf32>
    %8 = arith.mulf %7, %6 : vector<32x256xf32>
    %cst_7 = arith.constant 0.707106769 : f32
    %9 = vector.broadcast %cst_7 : f32 to vector<32x256xf32>
    %10 = arith.mulf %6, %9 : vector<32x256xf32>
    %11 = math.absf %10 : vector<32x256xf32>
    %cst_8 = arith.constant 0.327591091 : f32
    %12 = vector.broadcast %cst_8 : f32 to vector<32x256xf32>
    %13 = arith.mulf %12, %11 : vector<32x256xf32>
    %cst_9 = arith.constant 1.000000e+00 : f32
    %14 = vector.broadcast %cst_9 : f32 to vector<32x256xf32>
    %15 = arith.addf %14, %13 : vector<32x256xf32>
    %16 = tpu.reciprocal %15 {approx = true} : vector<32x256xf32> -> vector<32x256xf32>
    %cst_10 = arith.constant 1.06140542 : f32
    %17 = vector.broadcast %cst_10 : f32 to vector<32x256xf32>
    %18 = arith.mulf %17, %16 : vector<32x256xf32>
    %cst_11 = arith.constant -1.45315206 : f32
    %19 = vector.broadcast %cst_11 : f32 to vector<32x256xf32>
    %20 = arith.addf %18, %19 : vector<32x256xf32>
    %21 = arith.mulf %20, %16 : vector<32x256xf32>
    %cst_12 = arith.constant 1.42141378 : f32
    %22 = vector.broadcast %cst_12 : f32 to vector<32x256xf32>
    %23 = arith.addf %21, %22 : vector<32x256xf32>
    %24 = arith.mulf %23, %16 : vector<32x256xf32>
    %cst_13 = arith.constant -0.284496725 : f32
    %25 = vector.broadcast %cst_13 : f32 to vector<32x256xf32>
    %26 = arith.addf %24, %25 : vector<32x256xf32>
    %27 = arith.mulf %26, %16 : vector<32x256xf32>
    %cst_14 = arith.constant 0.254829586 : f32
    %28 = vector.broadcast %cst_14 : f32 to vector<32x256xf32>
    %29 = arith.addf %27, %28 : vector<32x256xf32>
    %30 = arith.mulf %29, %16 : vector<32x256xf32>
    %cst_15 = arith.constant 0.000000e+00 : f32
    %31 = vector.broadcast %cst_15 : f32 to vector<32x256xf32>
    %32 = arith.subf %31, %11 : vector<32x256xf32>
    %33 = arith.mulf %32, %11 : vector<32x256xf32>
    %34 = math.exp %33 : vector<32x256xf32>
    %35 = arith.mulf %30, %34 : vector<32x256xf32>
    %cst_16 = arith.constant 1.000000e+00 : f32
    %36 = vector.broadcast %cst_16 : f32 to vector<32x256xf32>
    %37 = arith.subf %36, %35 : vector<32x256xf32>
    %cst_17 = arith.constant 0.000000e+00 : f32
    %38 = vector.broadcast %cst_17 : f32 to vector<32x256xf32>
    %39 = arith.cmpf olt, %10, %38 : vector<32x256xf32>
    %cst_18 = arith.constant 0.000000e+00 : f32
    %40 = vector.broadcast %cst_18 : f32 to vector<32x256xf32>
    %41 = arith.subf %40, %37 : vector<32x256xf32>
    %42 = arith.select %39, %41, %37 : vector<32x256xi1>, vector<32x256xf32>
    %cst_19 = arith.constant 1.000000e+00 : f32
    %43 = vector.broadcast %cst_19 : f32 to vector<32x256xf32>
    %44 = arith.addf %43, %42 : vector<32x256xf32>
    %45 = arith.mulf %8, %44 : vector<32x256xf32>
    %c0_20 = arith.constant 0 : index
    %c0_21 = arith.constant 0 : index
    %c0_22 = arith.constant 0 : index
    %46 = vector.load %arg4[%c0_20, %c0_21, %c0_22] : memref<1x32x256xf32, #tpu.memory_space<vmem>>, vector<1x32x256xf32>
    %47 = vector.shape_cast %46 : vector<1x32x256xf32> to vector<32x256xf32>
    %48 = vector.shape_cast %45 : vector<32x256xf32> to vector<1x32x256xf32>
    tpu.vector_store %arg4[%c0_20, %c0_21, %c0_22], %48 {strides = array<i32>} : memref<1x32x256xf32, #tpu.memory_space<vmem>>, vector<1x32x256xf32>,
    return
  }
  func.func @transform_0(%arg0: i32) -> (i32, i32, i32) {
    %c0_i32 = arith.constant 0 : i32
    %c0_i32_0 = arith.constant 0 : i32
    %c0_i32_1 = arith.constant 0 : i32
    return %arg0, %c0_i32, %c0_i32_0 : i32, i32, i32
  }
  func.func @transform_1(%arg0: i32) -> (i32, i32) {
    %c0_i32 = arith.constant 0 : i32
    %c0_i32_0 = arith.constant 0 : i32
    %c0_i32_1 = arith.constant 0 : i32
    return %c0_i32, %c0_i32_0 : i32, i32
  }
  func.func @transform_2(%arg0: i32) -> (i32, i32) {
    %c0_i32 = arith.constant 0 : i32
    %c0_i32_0 = arith.constant 0 : i32
    %c0_i32_1 = arith.constant 0 : i32
    return %c0_i32, %c0_i32_0 : i32, i32
  }
  func.func @transform_3(%arg0: i32) -> (i32, i32, i32) {
    %c0_i32 = arith.constant 0 : i32
    %c0_i32_0 = arith.constant 0 : i32
    %c0_i32_1 = arith.constant 0 : i32
    return %arg0, %c0_i32, %c0_i32_0 : i32, i32, i32
  }
}

</mosaic_0001>

<llo_original>
// kernel: dense_layer_forward.1
$region0: #{dense_layer_forward.1}
  #allocation0 [shape = 'u32[]', space=smem, size = 0x4, offset = 0x4, fixed_abs, tag = 'smem constant byte address 0x4 - core index']
  #allocation1 [shape = 'u32[144,128]{1,0:T(1,128)}', space=vmem, size = 0x12000, scoped, tag = 'internal scratch']
  %s0 = inlined_call_operand.vmem [shape: bf16[2,36,256], index: 0, kind: input, shape index: {}]
  %s1 = inlined_call_operand.vmem [shape: bf16[32,36], index: 1, kind: input, shape index: {}]
  %s2 = inlined_call_operand.vmem [shape: f32[32,1], index: 2, kind: input, shape index: {}]
  %s3 = inlined_call_operand.vmem [shape: f32[2,32,256], index: 3, kind: output, shape index: {}]
  %s4 = sld [smem:[#allocation0]]
  $region45: #{dense_layer_forward.1} parent=0
    _
  %s6 = ssub.s32 1, %s4
  %s7 = scalar_select 0, %s6, %s4
  loop: start=0, step=1, limit=4
  $region2: #{dense_layer_forward.1} parent=0 // loop_pre_header
    _
  $region3: #{dense_layer_forward.1} parent=0 // loop_header
    %s9 = sphi 0, %s13
    %p10 = scmp.ge.s32.totalorder %s9, 4
    %s19 = sphi 0, %s21
    %s22 = sphi 0, %s19
    %s23 = sphi 0, %s22
    %s39 = sphi 0, %s23
    %s43 = sphi 0, %s43
    %s45 = sphi 0, %s43
    %s46 = sphi 0, %s45
    %s60 = sphi 0, %s46
    %s64 = sphi 0, %s64
    %s66 = sphi 0, %s64
    %s67 = sphi 0, %s66
    %s81 = sphi 0, %s67
    %s87 = sphi 0, %s89
    %s90 = sphi 0, %s87
    %s91 = sphi 0, %s90
    %s107 = sphi 0, %s91
  $region4: #{dense_layer_forward.1} parent=0 // loop_header_branch
    %12 = sbr.rel (%p10) target = $region8
  $region5: #{dense_layer_forward.1} parent=0 // loop_body
    %s14 = ssub.s32 %s9, 1
    %s15 = ssub.s32 %s9, 2
    %s16 = sadd.s32 %s9, 1
    %s17 = ssub.s32 %s9, %s16
    %p18 = scmp.eq.s32.totalorder %s17, 0
    %s20 = sadd.s32 %s19, 1
    %s21 = scalar_select %p18, %s19, %s20
    %p24 = pneg %p18
    %p25 = scmp.eq.s32.totalorder %s9, 1
    %p26 = por %p24, %p25
    %p27 = scmp.ne.s32.totalorder %s19, %s22
    %p28 = scmp.eq.s32.totalorder %s9, 0
    %p29 = por %p27, %p28
    %p30 = scmp.ne.s32.totalorder %s19, %s22
    %p31 = scmp.eq.s32.totalorder %s14, 1
    %p32 = por %p30, %p31
    %p33 = scmp.ne.s32.totalorder %s22, %s23
    %p34 = scmp.eq.s32.totalorder %s14, 0
    %p35 = por %p33, %p34
    %p36 = scmp.ne.s32.totalorder %s22, %s23
    %p37 = scmp.eq.s32.totalorder %s15, 1
    %p38 = por %p36, %p37
    %p40 = scmp.ne.s32.totalorder %s23, %s39
    %p41 = scmp.eq.s32.totalorder %s15, 0
    %p42 = por %p40, %p41
    %s44 = sadd.s32 %s43, 1
    %p47 = scmp.eq.s32.totalorder %s9, 1
    %p48 = scmp.ne.s32.totalorder %s43, %s45
    %p49 = scmp.eq.s32.totalorder %s9, 0
    %p50 = por %p48, %p49
    %p51 = scmp.ne.s32.totalorder %s43, %s45
    %p52 = scmp.eq.s32.totalorder %s14, 1
    %p53 = por %p51, %p52
    %p54 = scmp.ne.s32.totalorder %s45, %s46
    %p55 = scmp.eq.s32.totalorder %s14, 0
    %p56 = por %p54, %p55
    %p57 = scmp.ne.s32.totalorder %s45, %s46
    %p58 = scmp.eq.s32.totalorder %s15, 1
    %p59 = por %p57, %p58
    %p61 = scmp.ne.s32.totalorder %s46, %s60
    %p62 = scmp.eq.s32.totalorder %s15, 0
    %p63 = por %p61, %p62
    %s65 = sadd.s32 %s64, 1
    %p68 = scmp.eq.s32.totalorder %s9, 1
    %p69 = scmp.ne.s32.totalorder %s64, %s66
    %p70 = scmp.eq.s32.totalorder %s9, 0
    %p71 = por %p69, %p70
    %p72 = scmp.ne.s32.totalorder %s64, %s66
    %p73 = scmp.eq.s32.totalorder %s14, 1
    %p74 = por %p72, %p73
    %p75 = scmp.ne.s32.totalorder %s66, %s67
    %p76 = scmp.eq.s32.totalorder %s14, 0
    %p77 = por %p75, %p76
    %p78 = scmp.ne.s32.totalorder %s66, %s67
    %p79 = scmp.eq.s32.totalorder %s15, 1
    %p80 = por %p78, %p79
    %p82 = scmp.ne.s32.totalorder %s67, %s81
    %p83 = scmp.eq.s32.totalorder %s15, 0
    %p84 = por %p82, %p83
    %s85 = ssub.s32 %s9, %s16
    %p86 = scmp.eq.s32.totalorder %s85, 0
    %s88 = sadd.s32 %s87, 1
    %s89 = scalar_select %p86, %s87, %s88
    %p92 = pneg %p86
    %p93 = scmp.eq.s32.totalorder %s9, 1
    %p94 = por %p92, %p93
    %p95 = scmp.ne.s32.totalorder %s87, %s90
    %p96 = scmp.eq.s32.totalorder %s9, 0
    %p97 = por %p95, %p96
    %p98 = scmp.ne.s32.totalorder %s87, %s90
    %p99 = scmp.eq.s32.totalorder %s14, 1
    %p100 = por %p98, %p99
    %p101 = scmp.ne.s32.totalorder %s90, %s91
    %p102 = scmp.eq.s32.totalorder %s14, 0
    %p103 = por %p101, %p102
    %p104 = scmp.ne.s32.totalorder %s90, %s91
    %p105 = scmp.eq.s32.totalorder %s15, 1
    %p106 = por %p104, %p105
    %p108 = scmp.ne.s32.totalorder %s91, %s107
    %p109 = scmp.eq.s32.totalorder %s15, 0
    %p110 = por %p108, %p109
    %p111 = scmp.le.s32.totalorder 1, %s9
    %p112 = scmp.lt.s32.totalorder %s9, 3
    %p113 = pnand %p111, %p112
    %p114 = pneg %p113
    // Predicated region
    $region9: #{dense_layer_forward.1} parent=5 // pred_check
      _
    $region10: #{dense_layer_forward.1} parent=5 // pred_check_branch
      %116 = sbr.rel (%p113) target = $region12
    $region11: #{dense_layer_forward.1} parent=5 // pred_region
      %s117 = ssub.s32 %s9, 1
      // Predicated region
      $region13: #{dense_layer_forward.1} parent=11 // pred_check
        %p118 = pneg %p56
      $region14: #{dense_layer_forward.1} parent=11 // pred_check_branch
        %120 = sbr.rel (%p118) target = $region16
      $region15: #{dense_layer_forward.1} parent=11 // pred_region
        _
      $region16: #{dense_layer_forward.1} parent=11 // pred_fallthru
        _
      // Predicated region
      $region17: #{dense_layer_forward.1} parent=11 // pred_check
        %p121 = pneg %p77
      $region18: #{dense_layer_forward.1} parent=11 // pred_check_branch
        %123 = sbr.rel (%p121) target = $region20
      $region19: #{dense_layer_forward.1} parent=11 // pred_region
        _
      $region20: #{dense_layer_forward.1} parent=11 // pred_fallthru
        _
    $region12: #{dense_layer_forward.1} parent=5 // pred_fallthru
      _
    %p124 = scmp.lt.s32.totalorder %s9, 2
    // Predicated region
    $region21: #{dense_layer_forward.1} parent=5 // pred_check
      %p125 = pneg %p124
    $region22: #{dense_layer_forward.1} parent=5 // pred_check_branch
      %127 = sbr.rel (%p125) target = $region24
    $region23: #{dense_layer_forward.1} parent=5 // pred_region
      // Predicated region
      $region25: #{dense_layer_forward.1} parent=23 // pred_check
        %p128 = pneg %p29
      $region26: #{dense_layer_forward.1} parent=23 // pred_check_branch
        %130 = sbr.rel (%p128) target = $region28
      $region27: #{dense_layer_forward.1} parent=23 // pred_region
        %p131 = scmp.lt.s32.totalorder %s9, 1
        %s132 = scalar_select %p131, %s9, 1
        %s133 = smul.addr %s132, 10
        %s134 = smul.addr %s133, 4
        %s135 = scalar_lea.vmem %s0, %s134
      $region28: #{dense_layer_forward.1} parent=23 // pred_fallthru
        _
    $region24: #{dense_layer_forward.1} parent=5 // pred_fallthru
      _
    %p136 = scmp.le.s32.totalorder 1, %s9
    %p137 = scmp.lt.s32.totalorder %s9, 3
    %p138 = pnand %p136, %p137
    %p139 = pneg %p138
    // Predicated region
    $region29: #{dense_layer_forward.1} parent=5 // pred_check
      _
    $region30: #{dense_layer_forward.1} parent=5 // pred_check_branch
      %141 = sbr.rel (%p138) target = $region32
    $region31: #{dense_layer_forward.1} parent=5 // pred_region
      %s142 = ssub.s32 %s9, 1
      %p143 = scmp.lt.s32.totalorder %s14, 1
      %s144 = scalar_select %p143, %s14, 1
      %s145 = smul.addr %s144, 10
      %s146 = smul.addr %s145, 4
      %s147 = scalar_lea.vmem %s0, %s146
      %p148 = pneg %p35
      %p149 = pneg %p32
      %p150 = pneg %p56
      %p151 = pneg %p53
      %p152 = pneg %p77
      %p153 = pneg %p74
      %p154 = pneg %p103
      %p155 = pneg %p100
      %p156 = scmp.lt.s32.totalorder %s14, 1
      %s157 = scalar_select %p156, %s14, 1
      %s158 = smul.addr %s157, 8
      %s159 = smul.addr %s158, 8
      %s160 = scalar_lea.vmem %s3, %s159
      %p161 = scmp.lt.s32.totalorder %s14, 1
      %s162 = scalar_select %p161, %s14, 1
      %s163 = smul.addr %s162, 10
      %s164 = smul.addr %s163, 4
      %s165 = scalar_lea.vmem %s0, %s164
      %p166 = scmp.lt.s32.totalorder %s14, 1
      %s167 = scalar_select %p166, %s14, 1
      %s168 = smul.addr %s167, 8
      %s169 = smul.addr %s168, 8
      %s170 = scalar_lea.vmem %s3, %s169
      %v172 = vld [vmem:[%s1] sm:$0xf]
      %v173 = vld [vmem:[%s1 + $0x4] sm:$0xf]
      %v174 = vld [vmem:[%s1 + $0x8] sm:$0xf]
      %v175 = vld [vmem:[%s1 + $0xc] sm:$0xf]
      %v176 = vld [vmem:[%s165] sm:$0xff]
      %v177 = vld [vmem:[%s165 + $0x8] sm:$0xff]
      %v178 = vld [vmem:[%s165 + $0x10] sm:$0xff]
      %v179 = vld [vmem:[%s165 + $0x18] sm:$0xff]
      %v180 = vld [vmem:[%s165 + $0x20] sm:$0x33]
      %v181 = vld [vmem:[%s2] sm:$0xff]
      %v182 = vld [vmem:[%s2 + $0x8] sm:$0xff]
      %v183 = vld [vmem:[%s2 + $0x10] sm:$0xff]
      %v184 = vld [vmem:[%s2 + $0x18] sm:$0xff]
      %186 = vset.pattern.permute.xlu0 0
      %187 = vperm.xlu0 %186, %v181
      %v188 = vpop.permute.xlu0 %187
      %191 = vset.pattern.permute.xlu0 0
      %192 = vperm.xlu0 %191, %v182
      %v193 = vpop.permute.xlu0 %192
      %196 = vset.pattern.permute.xlu0 0
      %197 = vperm.xlu0 %196, %v183
      %v198 = vpop.permute.xlu0 %197
      %201 = vset.pattern.permute.xlu0 0
      %202 = vperm.xlu0 %201, %v184
      %v203 = vpop.permute.xlu0 %202
      %v209 = vunpack.c.l.b16 %v172
      %v210 = vunpack.c.l.b16 %v173
      %v211 = vunpack.c.l.b16 %v174
      %v212 = vunpack.c.l.b16 %v175
      %v213 = vpack.c.b16 %v210, %v209
      %v214 = vpack.c.b16 %v212, %v211
      %v220 = vunpack.c.l.b16 %v176
      %v221 = vunpack.c.h.b16 %v176
      %v222 = vunpack.c.l.b16 %v177
      %v223 = vunpack.c.h.b16 %v177
      %v224 = vunpack.c.l.b16 %v178
      %v225 = vunpack.c.h.b16 %v178
      %v226 = vunpack.c.l.b16 %v179
      %v227 = vunpack.c.h.b16 %v179
      %v228 = vunpack.c.l.b16 %v180
      %v229 = vunpack.c.h.b16 %v180
      %v230 = vpack.c.b16 %v222, %v220
      %v231 = vpack.c.b16 %v223, %v221
      %v232 = vpack.c.b16 %v226, %v224
      %v233 = vpack.c.b16 %v227, %v225
      %v234 = vpack.c.b16 %v228, %v228
      %v235 = vpack.c.b16 %v229, %v229
      %vm240 = vcmask 293888
      %v242 = vsel %vm240, %v213, 0
      %v245 = vsel %vm240, %v214, 0
      %vm247 = vcmask 1041408
      %v249 = vsel %vm247, %v234, 0
      %v252 = vsel %vm247, %v235, 0
      %254 = vmatprep.subr.bf16.mxu0 %v231
      %255 = vmatpush1.bf16.msra.mxu0 %v230
      %256 = vmatprep.subr.bf16.mxu0 %v233
      %257 = vmatpush1.bf16.msra.mxu0 %v232
      %258 = vmatprep.subr.bf16.mxu0 %v252
      %259 = vmatpush1.bf16.msra.mxu0 %v249
      %260 = vmatprep.subr.bf16.mxu0 0
      %261 = vmatpush1.bf16.msra.mxu0 0
      %262 = vmatprep.subr.bf16.mxu0 0
      %263 = vmatpush1.bf16.msra.mxu0 0
      %264 = vmatprep.subr.bf16.mxu0 0
      %265 = vmatpush1.bf16.msra.mxu0 0
      %266 = vmatprep.subr.bf16.mxu0 0
      %267 = vmatpush1.bf16.msra.mxu0 0
      %268 = vmatprep.subr.bf16.mxu0 0
      %269 = vmatpush1.bf16.msra.mxu0 0
      %270 = vmatprep.subr.bf16.mxu0 0
      %271 = vmatpush1.bf16.msra.mxu0 0
      %272 = vmatprep.subr.bf16.mxu0 0
      %273 = vmatpush1.bf16.msra.mxu0 0
      %274 = vmatprep.subr.bf16.mxu0 0
      %275 = vmatpush1.bf16.msra.mxu0 0
      %276 = vmatprep.subr.bf16.mxu0 0
      %277 = vmatpush1.bf16.msra.mxu0 0
      %278 = vmatprep.subr.bf16.mxu0 0
      %279 = vmatpush1.bf16.msra.mxu0 0
      %280 = vmatprep.subr.bf16.mxu0 0
      %281 = vmatpush1.bf16.msra.mxu0 0
      %282 = vmatprep.subr.bf16.mxu0 0
      %283 = vmatpush1.bf16.msra.mxu0 0
      %284 = vmatprep.subr.bf16.mxu0 0
      %285 = vmatpush1.bf16.msra.mxu0 0
      %286 = vmatprep.mubr.bf16.mxu0 0
      %287 = vmatmul.mubr.bf16.gmra.mrb[0].mxu0 %v242
      %v288 = vpop.f32.mrb[0].mxu0
      %v289 = vadd.f32 %v188, %v288
      %v290 = vpop.f32.mrb[0].mxu0
      %v291 = vadd.f32 %v188, %v290
      %v292 = vpop.f32.mrb[0].mxu0
      %v293 = vadd.f32 %v193, %v292
      %v294 = vpop.f32.mrb[0].mxu0
      %v295 = vadd.f32 %v193, %v294
      %296 = vmatprep.mubr.bf16.mxu0 0
      %297 = vmatmul.mubr.bf16.gmra.mrb[0].mxu0 %v245
      %v298 = vpop.f32.mrb[0].mxu0
      %v299 = vadd.f32 %v198, %v298
      %v300 = vpop.f32.mrb[0].mxu0
      %v301 = vadd.f32 %v198, %v300
      %v302 = vpop.f32.mrb[0].mxu0
      %v303 = vadd.f32 %v203, %v302
      %v304 = vpop.f32.mrb[0].mxu0
      %v305 = vadd.f32 %v203, %v304
      %306 = vdwg.mxu0
      %v307 = vmul.f32 %v289, 0.5
      %v308 = vmul.f32 %v291, 0.5
      %v309 = vmul.f32 %v293, 0.5
      %v310 = vmul.f32 %v295, 0.5
      %v311 = vmul.f32 %v299, 0.5
      %v312 = vmul.f32 %v301, 0.5
      %v313 = vmul.f32 %v303, 0.5
      %v314 = vmul.f32 %v305, 0.5
      %v315 = vmul.f32 %v289, 0.70710677
      %v316 = vmul.f32 %v291, 0.70710677
      %v317 = vmul.f32 %v293, 0.70710677
      %v318 = vmul.f32 %v295, 0.70710677
      %v319 = vmul.f32 %v299, 0.70710677
      %v320 = vmul.f32 %v301, 0.70710677
      %v321 = vmul.f32 %v303, 0.70710677
      %v322 = vmul.f32 %v305, 0.70710677
      %v323 = vand.u32 2147483647, %v315
      %v324 = vand.u32 2147483647, %v316
      %v325 = vand.u32 2147483647, %v317
      %v326 = vand.u32 2147483647, %v318
      %v327 = vand.u32 2147483647, %v319
      %v328 = vand.u32 2147483647, %v320
      %v329 = vand.u32 2147483647, %v321
      %v330 = vand.u32 2147483647, %v322
      %v331 = vmul.f32 %v323, 0.3275911
      %v332 = vmul.f32 %v324, 0.3275911
      %v333 = vmul.f32 %v325, 0.3275911
      %v334 = vmul.f32 %v326, 0.3275911
      %v335 = vmul.f32 %v327, 0.3275911
      %v336 = vmul.f32 %v328, 0.3275911
      %v337 = vmul.f32 %v329, 0.3275911
      %v338 = vmul.f32 %v330, 0.3275911
      %v339 = vadd.f32 %v331, 1.0
      %v340 = vadd.f32 %v332, 1.0
      %v341 = vadd.f32 %v333, 1.0
      %v342 = vadd.f32 %v334, 1.0
      %v343 = vadd.f32 %v335, 1.0
      %v344 = vadd.f32 %v336, 1.0
      %v345 = vadd.f32 %v337, 1.0
      %v346 = vadd.f32 %v338, 1.0
      %v347 = vrcp.pop %v339
      %v348 = vrcp.pop %v340
      %v349 = vrcp.pop %v341
      %v350 = vrcp.pop %v342
      %v351 = vrcp.pop %v343
      %v352 = vrcp.pop %v344
      %v353 = vrcp.pop %v345
      %v354 = vrcp.pop %v346
      %v355 = vmul.f32 %v347, 1.0614054
      %v356 = vmul.f32 %v348, 1.0614054
      %v357 = vmul.f32 %v349, 1.0614054
      %v358 = vmul.f32 %v350, 1.0614054
      %v359 = vmul.f32 %v351, 1.0614054
      %v360 = vmul.f32 %v352, 1.0614054
      %v361 = vmul.f32 %v353, 1.0614054
      %v362 = vmul.f32 %v354, 1.0614054
      %v363 = vadd.f32 %v355, -1.4531521
      %v364 = vadd.f32 %v356, -1.4531521
      %v365 = vadd.f32 %v357, -1.4531521
      %v366 = vadd.f32 %v358, -1.4531521
      %v367 = vadd.f32 %v359, -1.4531521
      %v368 = vadd.f32 %v360, -1.4531521
      %v369 = vadd.f32 %v361, -1.4531521
      %v370 = vadd.f32 %v362, -1.4531521
      %v371 = vmul.f32 %v363, %v347
      %v372 = vmul.f32 %v364, %v348
      %v373 = vmul.f32 %v365, %v349
      %v374 = vmul.f32 %v366, %v350
      %v375 = vmul.f32 %v367, %v351
      %v376 = vmul.f32 %v368, %v352
      %v377 = vmul.f32 %v369, %v353
      %v378 = vmul.f32 %v370, %v354
      %v379 = vadd.f32 %v371, 1.4214138
      %v380 = vadd.f32 %v372, 1.4214138
      %v381 = vadd.f32 %v373, 1.4214138
      %v382 = vadd.f32 %v374, 1.4214138
      %v383 = vadd.f32 %v375, 1.4214138
      %v384 = vadd.f32 %v376, 1.4214138
      %v385 = vadd.f32 %v377, 1.4214138
      %v386 = vadd.f32 %v378, 1.4214138
      %v387 = vmul.f32 %v379, %v347
      %v388 = vmul.f32 %v380, %v348
      %v389 = vmul.f32 %v381, %v349
      %v390 = vmul.f32 %v382, %v350
      %v391 = vmul.f32 %v383, %v351
      %v392 = vmul.f32 %v384, %v352
      %v393 = vmul.f32 %v385, %v353
      %v394 = vmul.f32 %v386, %v354
      %v395 = vadd.f32 %v387, -0.28449672
      %v396 = vadd.f32 %v388, -0.28449672
      %v397 = vadd.f32 %v389, -0.28449672
      %v398 = vadd.f32 %v390, -0.28449672
      %v399 = vadd.f32 %v391, -0.28449672
      %v400 = vadd.f32 %v392, -0.28449672
      %v401 = vadd.f32 %v393, -0.28449672
      %v402 = vadd.f32 %v394, -0.28449672
      %v403 = vmul.f32 %v395, %v347
      %v404 = vmul.f32 %v396, %v348
      %v405 = vmul.f32 %v397, %v349
      %v406 = vmul.f32 %v398, %v350
      %v407 = vmul.f32 %v399, %v351
      %v408 = vmul.f32 %v400, %v352
      %v409 = vmul.f32 %v401, %v353
      %v410 = vmul.f32 %v402, %v354
      %v411 = vadd.f32 %v403, 0.2548296
      %v412 = vadd.f32 %v404, 0.2548296
      %v413 = vadd.f32 %v405, 0.2548296
      %v414 = vadd.f32 %v406, 0.2548296
      %v415 = vadd.f32 %v407, 0.2548296
      %v416 = vadd.f32 %v408, 0.2548296
      %v417 = vadd.f32 %v409, 0.2548296
      %v418 = vadd.f32 %v410, 0.2548296
      %v419 = vmul.f32 %v411, %v347
      %v420 = vmul.f32 %v412, %v348
      %v421 = vmul.f32 %v413, %v349
      %v422 = vmul.f32 %v414, %v350
      %v423 = vmul.f32 %v415, %v351
      %v424 = vmul.f32 %v416, %v352
      %v425 = vmul.f32 %v417, %v353
      %v426 = vmul.f32 %v418, %v354
      %v427 = vsub.f32 0.0, %v323
      %v428 = vsub.f32 0.0, %v324
      %v429 = vsub.f32 0.0, %v325
      %v430 = vsub.f32 0.0, %v326
      %v431 = vsub.f32 0.0, %v327
      %v432 = vsub.f32 0.0, %v328
      %v433 = vsub.f32 0.0, %v329
      %v434 = vsub.f32 0.0, %v330
      %v435 = vmul.f32 %v427, %v323
      %v436 = vmul.f32 %v428, %v324
      %v437 = vmul.f32 %v429, %v325
      %v438 = vmul.f32 %v430, %v326
      %v439 = vmul.f32 %v431, %v327
      %v440 = vmul.f32 %v432, %v328
      %v441 = vmul.f32 %v433, %v329
      %v442 = vmul.f32 %v434, %v330
      %v443 = vmul.f32 %v435, 1.442695
      %v444 = vpow.pop %v443
      %v445 = vmul.f32 %v436, 1.442695
      %v446 = vpow.pop %v445
      %v447 = vmul.f32 %v437, 1.442695
      %v448 = vpow.pop %v447
      %v449 = vmul.f32 %v438, 1.442695
      %v450 = vpow.pop %v449
      %v451 = vmul.f32 %v439, 1.442695
      %v452 = vpow.pop %v451
      %v453 = vmul.f32 %v440, 1.442695
      %v454 = vpow.pop %v453
      %v455 = vmul.f32 %v441, 1.442695
      %v456 = vpow.pop %v455
      %v457 = vmul.f32 %v442, 1.442695
      %v458 = vpow.pop %v457
      %v459 = vmul.f32 %v419, %v444
      %v460 = vmul.f32 %v420, %v446
      %v461 = vmul.f32 %v421, %v448
      %v462 = vmul.f32 %v422, %v450
      %v463 = vmul.f32 %v423, %v452
      %v464 = vmul.f32 %v424, %v454
      %v465 = vmul.f32 %v425, %v456
      %v466 = vmul.f32 %v426, %v458
      %v467 = vsub.f32 1.0, %v459
      %v468 = vsub.f32 1.0, %v460
      %v469 = vsub.f32 1.0, %v461
      %v470 = vsub.f32 1.0, %v462
      %v471 = vsub.f32 1.0, %v463
      %v472 = vsub.f32 1.0, %v464
      %v473 = vsub.f32 1.0, %v465
      %v474 = vsub.f32 1.0, %v466
      %vm475 = vcmp.lt.f32.partialorder %v315, 0.0
      %vm476 = vcmp.lt.f32.partialorder %v316, 0.0
      %vm477 = vcmp.lt.f32.partialorder %v317, 0.0
      %vm478 = vcmp.lt.f32.partialorder %v318, 0.0
      %vm479 = vcmp.lt.f32.partialorder %v319, 0.0
      %vm480 = vcmp.lt.f32.partialorder %v320, 0.0
      %vm481 = vcmp.lt.f32.partialorder %v321, 0.0
      %vm482 = vcmp.lt.f32.partialorder %v322, 0.0
      %v483 = vsub.f32 0.0, %v467
      %v484 = vsub.f32 0.0, %v468
      %v485 = vsub.f32 0.0, %v469
      %v486 = vsub.f32 0.0, %v470
      %v487 = vsub.f32 0.0, %v471
      %v488 = vsub.f32 0.0, %v472
      %v489 = vsub.f32 0.0, %v473
      %v490 = vsub.f32 0.0, %v474
      %v491 = vsel %vm475, %v483, %v467
      %v492 = vsel %vm476, %v484, %v468
      %v493 = vsel %vm477, %v485, %v469
      %v494 = vsel %vm478, %v486, %v470
      %v495 = vsel %vm479, %v487, %v471
      %v496 = vsel %vm480, %v488, %v472
      %v497 = vsel %vm481, %v489, %v473
      %v498 = vsel %vm482, %v490, %v474
      %v499 = vadd.f32 %v491, 1.0
      %v500 = vadd.f32 %v492, 1.0
      %v501 = vadd.f32 %v493, 1.0
      %v502 = vadd.f32 %v494, 1.0
      %v503 = vadd.f32 %v495, 1.0
      %v504 = vadd.f32 %v496, 1.0
      %v505 = vadd.f32 %v497, 1.0
      %v506 = vadd.f32 %v498, 1.0
      %v507 = vmul.f32 %v307, %v499
      %v508 = vmul.f32 %v308, %v500
      %v509 = vmul.f32 %v309, %v501
      %v510 = vmul.f32 %v310, %v502
      %v511 = vmul.f32 %v311, %v503
      %v512 = vmul.f32 %v312, %v504
      %v513 = vmul.f32 %v313, %v505
      %v514 = vmul.f32 %v314, %v506
      %515 = vst [vmem:[%s170] sm:$0xff] %v507
      %516 = vst [vmem:[%s170 + $0x8] sm:$0xff] %v508
      %517 = vst [vmem:[%s170 + $0x10] sm:$0xff] %v509
      %518 = vst [vmem:[%s170 + $0x18] sm:$0xff] %v510
      %519 = vst [vmem:[%s170 + $0x20] sm:$0xff] %v511
      %520 = vst [vmem:[%s170 + $0x28] sm:$0xff] %v512
      %521 = vst [vmem:[%s170 + $0x30] sm:$0xff] %v513
      %522 = vst [vmem:[%s170 + $0x38] sm:$0xff] %v514
      %p523 = scmp.lt.s32.totalorder %s14, 1
      %s524 = scalar_select %p523, %s14, 1
      %s525 = smul.addr %s524, 8
      %s526 = smul.addr %s525, 8
      %s527 = scalar_lea.vmem %s3, %s526
      // Predicated region
      $region33: #{dense_layer_forward.1} parent=31 // pred_check
        %p528 = pneg %p100
      $region34: #{dense_layer_forward.1} parent=31 // pred_check_branch
        %530 = sbr.rel (%p528) target = $region36
      $region35: #{dense_layer_forward.1} parent=31 // pred_region
        _
      $region36: #{dense_layer_forward.1} parent=31 // pred_fallthru
        _
    $region32: #{dense_layer_forward.1} parent=5 // pred_fallthru
      _
    %p531 = scmp.le.s32.totalorder 2, %s9
    // Predicated region
    $region37: #{dense_layer_forward.1} parent=5 // pred_check
      %p532 = pneg %p531
    $region38: #{dense_layer_forward.1} parent=5 // pred_check_branch
      %534 = sbr.rel (%p532) target = $region40
    $region39: #{dense_layer_forward.1} parent=5 // pred_region
      %s535 = ssub.s32 %s9, 2
      // Predicated region
      $region41: #{dense_layer_forward.1} parent=39 // pred_check
        %p536 = pneg %p106
      $region42: #{dense_layer_forward.1} parent=39 // pred_check_branch
        %538 = sbr.rel (%p536) target = $region44
      $region43: #{dense_layer_forward.1} parent=39 // pred_region
        %p539 = scmp.lt.s32.totalorder %s15, 1
        %s540 = scalar_select %p539, %s15, 1
        %s541 = smul.addr %s540, 8
        %s542 = smul.addr %s541, 8
        %s543 = scalar_lea.vmem %s3, %s542
      $region44: #{dense_layer_forward.1} parent=39 // pred_fallthru
        _
    $region40: #{dense_layer_forward.1} parent=5 // pred_fallthru
      _
  $region6: #{dense_layer_forward.1} parent=0 // loop_footer
    %s13 = sadd.s32 1, %s9
  $region7: #{dense_layer_forward.1} parent=0 // loop_footer_branch
    %8 = sbr.rel target = $region3
  $region8: #{dense_layer_forward.1} parent=0 // loop_exit
    _

</llo_original>
